<compile_context>
chip_gen: v7x
topology: tpu7x:2x2x1
jax: 0.10.0
libtpu: 0.0.40
codegen_flags: <defaults>
</compile_context>

<pallas_src>
import jax
import jax.numpy as jnp
from jax.experimental import pallas as pl
from jax.experimental.pallas import tpu as pltpu

_SUBLANE = 8  # f32 sublane count (second-to-last dim granularity)


def _round_up(x, m):
    return ((x + m - 1) // m) * m


def _mlp_actor_kernel(limit_ref,          # (1, 1) SMEM scalar: act_limit
                      obs_ref,            # (TM, obs_dim) VMEM tile
                      w1_ref, b1_ref,     # (obs_dim, H1), (1, H1)
                      w2_ref, b2_ref,     # (H1, H2),      (1, H2)
                      w3_ref, b3_ref,     # (H2, A),       (1, A)
                      out_ref):           # (TM, A)
    """Fused 3-layer MLP: ReLU -> ReLU -> Tanh, scaled by act_limit.

    MXU input dtype follows the dtype of obs/weights (f32 or pre-cast bf16);
    accumulation and the elementwise epilogue are always f32.
    """
    act_limit = limit_ref[0, 0]

    # layer 1: Linear + ReLU
    h1 = jnp.dot(obs_ref[...], w1_ref[...],
                 preferred_element_type=jnp.float32) + b1_ref[...]
    h1 = jnp.maximum(h1, 0.0)

    # layer 2: Linear + ReLU
    h2 = jnp.dot(h1.astype(w2_ref.dtype), w2_ref[...],
                 preferred_element_type=jnp.float32) + b2_ref[...]
    h2 = jnp.maximum(h2, 0.0)

    # output layer: Linear + Tanh, scaled by act_limit
    y = jnp.dot(h2.astype(w3_ref.dtype), w3_ref[...],
                preferred_element_type=jnp.float32) + b3_ref[...]
    out_ref[...] = (act_limit * jnp.tanh(y)).astype(out_ref.dtype)


def _pick_tile_m(batch):
    """Batch tile size.

    - batch <= 8: single tile (block dim equals the full array dim).
    - otherwise: aim for >= 2 grid steps so both v7x TensorCores get work,
      rounded to the 8-row sublane granularity, capped at 1024 rows.
    """
    if batch <= _SUBLANE:
        return batch
    tm = _round_up(pl.cdiv(batch, 2), _SUBLANE)
    return min(tm, 1024)


def prepare_params(params, *, use_bf16_matmul=False):
    """One-time parameter prep (do this OUTSIDE the per-call path / cache it).

    Biases are normalized to (1, fan_out) f32; weights are optionally cast to
    bf16 once in HBM (halves weight/obs DMA and removes per-step VPU casts).
    """
    w_dtype = jnp.bfloat16 if use_bf16_matmul else jnp.float32
    prepped = []
    for w, b in params:
        prepped.append((jnp.asarray(w, dtype=w_dtype),
                        jnp.asarray(b, dtype=jnp.float32).reshape(1, -1)))
    return prepped


def mlp_actor_forward(obs, params, act_limit, *, out_dtype=jnp.float32):
    """Batch-tiled fused MLP actor.

    obs: (batch, obs_dim) float32.  params: output of prepare_params().
    The MXU input dtype is taken from the weight dtype (f32 or bf16).
    """
    (w1, b1), (w2, b2), (w3, b3) = params
    batch, obs_dim = obs.shape
    act_dim = w3.shape[1]

    # Match obs dtype to the (possibly bf16) weight dtype so MXU inputs agree
    # and obs DMA bytes are halved in bf16 mode.
    obs_in = obs if obs.dtype == w1.dtype else obs.astype(w1.dtype)

    tm = _pick_tile_m(batch)
    grid = (pl.cdiv(batch, tm),)

    # Keep act_limit a traced (1,1) array so sweeping it under jit does not
    # force recompiles.
    limit = jnp.asarray(act_limit, dtype=jnp.float32).reshape(1, 1)

    # Weights/biases: full-array blocks whose index never changes -> VMEM
    # resident across the whole grid (total < ~40 KB here).
    full = lambda a: pl.BlockSpec(a.shape, lambda i: (0, 0))

    out = pl.pallas_call(
        _mlp_actor_kernel,
        out_shape=jax.ShapeDtypeStruct((batch, act_dim), out_dtype),
        grid=grid,
        in_specs=[
            pl.BlockSpec(memory_space=pltpu.MemorySpace.SMEM),       # act_limit
            pl.BlockSpec((tm, obs_dim), lambda i: (i, 0)),           # obs tile
            full(w1), full(b1),
            full(w2), full(b2),
            full(w3), full(b3),
        ],
        out_specs=pl.BlockSpec((tm, act_dim), lambda i: (i, 0)),
        compiler_params=pltpu.CompilerParams(
            dimension_semantics=("parallel",)),                      # v7x megacore
    )(limit, obs_in, w1, b1, w2, b2, w3, b3)

    return out


def init_params(key, obs_dim, hidden_sizes, act_dim, dtype=jnp.float32):
    """Deterministic synthetic init (roughly PyTorch Linear uniform scaling)."""
    sizes = [obs_dim] + list(hidden_sizes) + [act_dim]
    params = []
    for j in range(len(sizes) - 1):
        fan_in, fan_out = sizes[j], sizes[j + 1]
        key, kw, kb = jax.random.split(key, 3)
        bound = 1.0 / jnp.sqrt(jnp.float32(fan_in))
        w = jax.random.uniform(kw, (fan_in, fan_out), dtype, -bound, bound)
        b = jax.random.uniform(kb, (1, fan_out), dtype, -bound, bound)
        params.append((w, b))
    return params


def mlp_actor_reference(obs, params, act_limit):
    """Pure-JAX f32 reference for correctness checks."""
    (w1, b1), (w2, b2), (w3, b3) = params
    h = jnp.maximum(obs @ w1 + b1, 0.0)
    h = jnp.maximum(h @ w2 + b2, 0.0)
    return act_limit * jnp.tanh(h @ w3 + b3)


if __name__ == "__main__":
    # Small shapes consistent with the module: flat obs vector -> action vector.
    batch = 8
    obs_dim = 32
    hidden_sizes = (64, 64)
    act_dim = 8
    act_limit = 2.0

    key = jax.random.PRNGKey(0)
    key, kobs = jax.random.split(key)
    obs = jax.random.normal(kobs, (batch, obs_dim), dtype=jnp.float32)

    raw_params = init_params(key, obs_dim, hidden_sizes, act_dim)

    # ---- f32 MXU path (tight check against f32 reference) ----
    params_f32 = prepare_params(raw_params, use_bf16_matmul=False)
    out = jax.block_until_ready(mlp_actor_forward(obs, params_f32, act_limit))
    ref = mlp_actor_reference(obs, raw_params, act_limit)
    assert out.shape == (batch, act_dim)
    assert jnp.allclose(out, ref, atol=1e-5, rtol=1e-5), "f32 mismatch vs reference"

    # ---- batch-tiled path: grid > 1 (512-row tiles), no batch padding ----
    key, kbig = jax.random.split(key)
    big_obs = jax.random.normal(kbig, (1024, obs_dim), dtype=jnp.float32)
    big_out = jax.block_until_ready(
        mlp_actor_forward(big_obs, params_f32, act_limit))
    big_ref = mlp_actor_reference(big_obs, raw_params, act_limit)
    assert big_out.shape == (1024, act_dim)
    assert jnp.allclose(big_out, big_ref, atol=1e-5, rtol=1e-5), "big-batch mismatch"

    # ---- ragged final tile: batch not a multiple of the tile size ----
    key, krag = jax.random.split(key)
    rag_obs = jax.random.normal(krag, (600, obs_dim), dtype=jnp.float32)
    rag_out = jax.block_until_ready(
        mlp_actor_forward(rag_obs, params_f32, act_limit))
    rag_ref = mlp_actor_reference(rag_obs, raw_params, act_limit)
    assert rag_out.shape == (600, act_dim)
    assert jnp.allclose(rag_out, rag_ref, atol=1e-5, rtol=1e-5), "ragged-batch mismatch"

    # ---- bf16 MXU path (pre-cast weights/obs in HBM), loose tolerance ----
    params_bf16 = prepare_params(raw_params, use_bf16_matmul=True)
    bf_out = jax.block_until_ready(
        mlp_actor_forward(big_obs, params_bf16, act_limit))
    assert bf_out.shape == (1024, act_dim)
    assert jnp.allclose(bf_out, big_ref, atol=7.5e-2, rtol=7.5e-2), "bf16 mismatch"

    print("KERNEL_OK")
</pallas_src>

<mosaic_0001>
module attributes {stable_mosaic.version = 11 : i64} {
  func.func @_mlp_actor_kernel(%arg0: i32, %arg1: memref<1x1xf32, #tpu.memory_space<smem>>, %arg2: memref<8x32xf32, #tpu.memory_space<vmem>>, %arg3: memref<32x64xf32, #tpu.memory_space<vmem>>, %arg4: memref<1x64xf32, #tpu.memory_space<vmem>>, %arg5: memref<64x64xf32, #tpu.memory_space<vmem>>, %arg6: memref<1x64xf32, #tpu.memory_space<vmem>>, %arg7: memref<64x8xf32, #tpu.memory_space<vmem>>, %arg8: memref<1x8xf32, #tpu.memory_space<vmem>>, %arg9: memref<8x8xf32, #tpu.memory_space<vmem>>) attributes {dimension_semantics = [#tpu.dimension_semantics<parallel>], iteration_bounds = array<i64: 1>, scalar_prefetch = 0 : i64, scratch_operands = 0 : i64, tpu.core_type = #tpu.core_type<tc>, window_params = [{transform_indices = @transform_0, window_bounds = array<i64: 1, 1>}, {transform_indices = @transform_1, window_bounds = array<i64: 8, 32>}, {pipeline_mode = #tpu.pipeline_mode<synchronous>, transform_indices = @transform_2, window_bounds = array<i64: 32, 64>}, {pipeline_mode = #tpu.pipeline_mode<synchronous>, transform_indices = @transform_3, window_bounds = array<i64: 1, 64>}, {pipeline_mode = #tpu.pipeline_mode<synchronous>, transform_indices = @transform_4, window_bounds = array<i64: 64, 64>}, {pipeline_mode = #tpu.pipeline_mode<synchronous>, transform_indices = @transform_5, window_bounds = array<i64: 1, 64>}, {pipeline_mode = #tpu.pipeline_mode<synchronous>, transform_indices = @transform_6, window_bounds = array<i64: 64, 8>}, {pipeline_mode = #tpu.pipeline_mode<synchronous>, transform_indices = @transform_7, window_bounds = array<i64: 1, 8>}, {transform_indices = @transform_8, window_bounds = array<i64: 8, 8>}]} {
    %c0 = arith.constant 0 : index
    %c0_0 = arith.constant 0 : index
    %0 = memref.load %arg1[%c0, %c0_0] : memref<1x1xf32, #tpu.memory_space<smem>>
    %c0_1 = arith.constant 0 : index
    %c0_2 = arith.constant 0 : index
    %1 = vector.load %arg2[%c0_1, %c0_2] : memref<8x32xf32, #tpu.memory_space<vmem>>, vector<8x32xf32>
    %c0_3 = arith.constant 0 : index
    %c0_4 = arith.constant 0 : index
    %2 = vector.load %arg3[%c0_3, %c0_4] : memref<32x64xf32, #tpu.memory_space<vmem>>, vector<32x64xf32>
    %cst = arith.constant dense<0.000000e+00> : vector<8x64xf32>
    %3 = tpu.matmul %1, %2, %cst {dimension_numbers = #tpu.dot_dimension_numbers<[1], [0], [0], [1], [0, 0, 1, 1], [], []>} : vector<8x32xf32>, vector<32x64xf32>, vector<8x64xf32> -> vector<8x64xf32>
    %c0_5 = arith.constant 0 : index
    %c0_6 = arith.constant 0 : index
    %4 = vector.load %arg4[%c0_5, %c0_6] : memref<1x64xf32, #tpu.memory_space<vmem>>, vector<1x64xf32>
    %5 = vector.broadcast %4 : vector<1x64xf32> to vector<8x64xf32>
    %6 = arith.addf %3, %5 : vector<8x64xf32>
    %cst_7 = arith.constant 0.000000e+00 : f32
    %7 = vector.broadcast %cst_7 : f32 to vector<8x64xf32>
    %8 = arith.maximumf %6, %7 : vector<8x64xf32>
    %c0_8 = arith.constant 0 : index
    %c0_9 = arith.constant 0 : index
    %9 = vector.load %arg5[%c0_8, %c0_9] : memref<64x64xf32, #tpu.memory_space<vmem>>, vector<64x64xf32>
    %cst_10 = arith.constant dense<0.000000e+00> : vector<8x64xf32>
    %10 = tpu.matmul %8, %9, %cst_10 {dimension_numbers = #tpu.dot_dimension_numbers<[1], [0], [0], [1], [0, 0, 1, 1], [], []>} : vector<8x64xf32>, vector<64x64xf32>, vector<8x64xf32> -> vector<8x64xf32>
    %c0_11 = arith.constant 0 : index
    %c0_12 = arith.constant 0 : index
    %11 = vector.load %arg6[%c0_11, %c0_12] : memref<1x64xf32, #tpu.memory_space<vmem>>, vector<1x64xf32>
    %12 = vector.broadcast %11 : vector<1x64xf32> to vector<8x64xf32>
    %13 = arith.addf %10, %12 : vector<8x64xf32>
    %cst_13 = arith.constant 0.000000e+00 : f32
    %14 = vector.broadcast %cst_13 : f32 to vector<8x64xf32>
    %15 = arith.maximumf %13, %14 : vector<8x64xf32>
    %c0_14 = arith.constant 0 : index
    %c0_15 = arith.constant 0 : index
    %16 = vector.load %arg7[%c0_14, %c0_15] : memref<64x8xf32, #tpu.memory_space<vmem>>, vector<64x8xf32>
    %cst_16 = arith.constant dense<0.000000e+00> : vector<8x8xf32>
    %17 = tpu.matmul %15, %16, %cst_16 {dimension_numbers = #tpu.dot_dimension_numbers<[1], [0], [0], [1], [0, 0, 1, 1], [], []>} : vector<8x64xf32>, vector<64x8xf32>, vector<8x8xf32> -> vector<8x8xf32>
    %c0_17 = arith.constant 0 : index
    %c0_18 = arith.constant 0 : index
    %18 = vector.load %arg8[%c0_17, %c0_18] : memref<1x8xf32, #tpu.memory_space<vmem>>, vector<1x8xf32>
    %19 = vector.broadcast %18 : vector<1x8xf32> to vector<8x8xf32>
    %20 = arith.addf %17, %19 : vector<8x8xf32>
    %21 = math.tanh %20 : vector<8x8xf32>
    %22 = vector.broadcast %0 : f32 to vector<8x8xf32>
    %23 = arith.mulf %22, %21 : vector<8x8xf32>
    %c0_19 = arith.constant 0 : index
    %c0_20 = arith.constant 0 : index
    %24 = vector.load %arg9[%c0_19, %c0_20] : memref<8x8xf32, #tpu.memory_space<vmem>>, vector<8x8xf32>
    tpu.vector_store %arg9[%c0_19, %c0_20], %23 {strides = array<i32>} : memref<8x8xf32, #tpu.memory_space<vmem>>, vector<8x8xf32>,
    return
  }
  func.func @transform_0(%arg0: i32) -> (i32, i32) {
    %c0_i32 = arith.constant 0 : i32
    %c0_i32_0 = arith.constant 0 : i32
    %c0_i32_1 = arith.constant 0 : i32
    return %c0_i32, %c0_i32_0 : i32, i32
  }
  func.func @transform_1(%arg0: i32) -> (i32, i32) {
    %c0_i32 = arith.constant 0 : i32
    %c0_i32_0 = arith.constant 0 : i32
    return %arg0, %c0_i32 : i32, i32
  }
  func.func @transform_2(%arg0: i32) -> (i32, i32) {
    %c0_i32 = arith.constant 0 : i32
    %c0_i32_0 = arith.constant 0 : i32
    %c0_i32_1 = arith.constant 0 : i32
    return %c0_i32, %c0_i32_0 : i32, i32
  }
  func.func @transform_3(%arg0: i32) -> (i32, i32) {
    %c0_i32 = arith.constant 0 : i32
    %c0_i32_0 = arith.constant 0 : i32
    %c0_i32_1 = arith.constant 0 : i32
    return %c0_i32, %c0_i32_0 : i32, i32
  }
  func.func @transform_4(%arg0: i32) -> (i32, i32) {
    %c0_i32 = arith.constant 0 : i32
    %c0_i32_0 = arith.constant 0 : i32
    %c0_i32_1 = arith.constant 0 : i32
    return %c0_i32, %c0_i32_0 : i32, i32
  }
  func.func @transform_5(%arg0: i32) -> (i32, i32) {
    %c0_i32 = arith.constant 0 : i32
    %c0_i32_0 = arith.constant 0 : i32
    %c0_i32_1 = arith.constant 0 : i32
    return %c0_i32, %c0_i32_0 : i32, i32
  }
  func.func @transform_6(%arg0: i32) -> (i32, i32) {
    %c0_i32 = arith.constant 0 : i32
    %c0_i32_0 = arith.constant 0 : i32
    %c0_i32_1 = arith.constant 0 : i32
    return %c0_i32, %c0_i32_0 : i32, i32
  }
  func.func @transform_7(%arg0: i32) -> (i32, i32) {
    %c0_i32 = arith.constant 0 : i32
    %c0_i32_0 = arith.constant 0 : i32
    %c0_i32_1 = arith.constant 0 : i32
    return %c0_i32, %c0_i32_0 : i32, i32
  }
  func.func @transform_8(%arg0: i32) -> (i32, i32) {
    %c0_i32 = arith.constant 0 : i32
    %c0_i32_0 = arith.constant 0 : i32
    return %arg0, %c0_i32 : i32, i32
  }
}

</mosaic_0001>

<llo_original>
// kernel: tpu_custom_call.1
$region0: #{tpu_custom_call.1}
  #allocation0 [shape = 'u32[]', space=smem, size = 0x4, offset = 0x4, fixed_abs, tag = 'smem constant byte address 0x4 - core index']
  #allocation1 [shape = 'u32[144,128]{1,0:T(1,128)}', space=vmem, size = 0x12000, scoped, tag = 'internal scratch']
  #allocation2 [shape = 'f32[1,1]{1,0:T(1,128)S(6)}', space=smem, size = 0x200, scoped, tag = 'scoped memory for tpu_custom_call.1']
  %s0 = inlined_call_operand.<no memory space> [shape: f32[1,1], index: 0, kind: input, shape index: {}]
  %s1 = inlined_call_operand.vmem [shape: f32[8,32], index: 1, kind: input, shape index: {}]
  %s2 = inlined_call_operand.hbm [shape: f32[32,64], index: 2, kind: input, shape index: {}]
  %s3 = inlined_call_operand.vmem [shape: f32[1,64], index: 3, kind: input, shape index: {}]
  %s4 = inlined_call_operand.vmem [shape: f32[64,64], index: 4, kind: input, shape index: {}]
  %s5 = inlined_call_operand.vmem [shape: f32[1,64], index: 5, kind: input, shape index: {}]
  %s6 = inlined_call_operand.vmem [shape: f32[64,8], index: 6, kind: input, shape index: {}]
  %s7 = inlined_call_operand.vmem [shape: f32[1,8], index: 7, kind: input, shape index: {}]
  %s8 = inlined_call_operand.hbm [shape: f32[8,8], index: 8, kind: output, shape index: {}]
  %s9 = sld [smem:[#allocation0]]
  $region46: #{tpu_custom_call.1} parent=0
    _
  %s11 = ssub.s32 1, %s9
  %s12 = scalar_select 0, %s11, %s9
  %13 = sst [smem:[#allocation2]] %s0
  $region1: #{tpu_custom_call.1} parent=0
    #allocation3 [shape = 'u8[16384]{0}', space=vmem, size = 0x4000, scoped, tag = 'input window, operand 2, single buffered']
    #allocation4 [shape = 's32[1]{0}', space=sflag, size = 0x4, scoped, tag = 'scoped memory for tpu_custom_call.1']
    #allocation5 [shape = 's32[1]{0}', space=sflag, size = 0x4, scoped, tag = 'scoped memory for tpu_custom_call.1']
    #allocation6 [shape = 'u8[4096]{0}', space=vmem, size = 0x1000, scoped, tag = 'output window, operand 0, single buffered']
    %14 = vsyncpa [#allocation4], 0
    %15 = vsyncpa [#allocation5], 0
    // Predicated region
    $region2: #{tpu_custom_call.1} parent=1 // pred_check
      _
    $region3: #{tpu_custom_call.1} parent=1 // pred_check_branch
      %17 = sbr.rel (0) target = $region5
    $region4: #{tpu_custom_call.1} parent=1 // pred_region
      _
    $region5: #{tpu_custom_call.1} parent=1 // pred_fallthru
      _
    // Predicated region
    $region6: #{tpu_custom_call.1} parent=1 // pred_check
      _
    $region7: #{tpu_custom_call.1} parent=1 // pred_check_branch
      %19 = sbr.rel (0) target = $region9
    $region8: #{tpu_custom_call.1} parent=1 // pred_region
      _
    $region9: #{tpu_custom_call.1} parent=1 // pred_fallthru
      _
    // Predicated region
    $region10: #{tpu_custom_call.1} parent=1 // pred_check
      _
    $region11: #{tpu_custom_call.1} parent=1 // pred_check_branch
      %21 = sbr.rel (0) target = $region13
    $region12: #{tpu_custom_call.1} parent=1 // pred_region
      %s23 = ssub.s32 512, 512
      %24 = vsyncadd [#allocation4], %s23
      %s25 = sshll.u32 [#allocation3], 4
      %s26 = int_to_ptr.vmem [resolvable:$true] %s25
      %31 = dma.hbm_to_vmem [thread:$0]  %s2, 512, %s26, [#allocation4], 128, 128, 8
    $region13: #{tpu_custom_call.1} parent=1 // pred_fallthru
      _
    // Predicated region
    $region14: #{tpu_custom_call.1} parent=1 // pred_check
      _
    $region15: #{tpu_custom_call.1} parent=1 // pred_check_branch
      %33 = sbr.rel (0) target = $region17
    $region16: #{tpu_custom_call.1} parent=1 // pred_region
      _
    $region17: #{tpu_custom_call.1} parent=1 // pred_fallthru
      _
    // Predicated region
    $region18: #{tpu_custom_call.1} parent=1 // pred_check
      _
    $region19: #{tpu_custom_call.1} parent=1 // pred_check_branch
      %35 = sbr.rel (0) target = $region21
    $region20: #{tpu_custom_call.1} parent=1 // pred_region
      _
    $region21: #{tpu_custom_call.1} parent=1 // pred_fallthru
      _
    // Predicated region
    $region22: #{tpu_custom_call.1} parent=1 // pred_check
      _
    $region23: #{tpu_custom_call.1} parent=1 // pred_check_branch
      %37 = sbr.rel (0) target = $region25
    $region24: #{tpu_custom_call.1} parent=1 // pred_region
      _
    $region25: #{tpu_custom_call.1} parent=1 // pred_fallthru
      _
    // Predicated region
    $region26: #{tpu_custom_call.1} parent=1 // pred_check
      _
    $region27: #{tpu_custom_call.1} parent=1 // pred_check_branch
      %39 = sbr.rel (0) target = $region29
    $region28: #{tpu_custom_call.1} parent=1 // pred_region
      _
    $region29: #{tpu_custom_call.1} parent=1 // pred_fallthru
      _
    // Predicated region
    $region30: #{tpu_custom_call.1} parent=1 // pred_check
      _
    $region31: #{tpu_custom_call.1} parent=1 // pred_check_branch
      %41 = sbr.rel (0) target = $region33
    $region32: #{tpu_custom_call.1} parent=1 // pred_region
      _
    $region33: #{tpu_custom_call.1} parent=1 // pred_fallthru
      _
    // Predicated region
    $region34: #{tpu_custom_call.1} parent=1 // pred_check
      _
    $region35: #{tpu_custom_call.1} parent=1 // pred_check_branch
      %43 = sbr.rel (0) target = $region37
    $region36: #{tpu_custom_call.1} parent=1 // pred_region
      %44 = dma.done [#allocation4], 512
    $region37: #{tpu_custom_call.1} parent=1 // pred_fallthru
      _
    %s45 = sld [smem:[#allocation2]]
    %v46 = vld [vmem:[%s1] sm:$0xff]
    %v47 = vld [vmem:[#allocation3] sm:$0xff]
    %v48 = vld [vmem:[#allocation3 + $0x8] sm:$0xff]
    %v49 = vld [vmem:[#allocation3 + $0x10] sm:$0xff]
    %v50 = vld [vmem:[#allocation3 + $0x18] sm:$0xff]
    %v51 = vld [vmem:[%s3] sm:$0x1]
    %v53 = vlaneseq
    %v54 = vshrl.u32 %v53, 7
    %v55 = vsub.s32 0, %v54
    %v56 = vrot.slane %v51, %v55
    %vm58 = vcmask 261120
    %v60 = vsel %vm58, %v46, 0
    %62 = vmatprep.subr.mxu0 0.0
    %63 = vmatpush1.msra.mxu0 %v47
    %64 = vmatprep.subr.mxu0 0.0
    %65 = vmatpush1.msra.mxu0 %v48
    %66 = vmatprep.subr.mxu0 0.0
    %67 = vmatpush1.msra.mxu0 %v49
    %68 = vmatprep.subr.mxu0 0.0
    %69 = vmatpush1.msra.mxu0 %v50
    %70 = vmatprep.subr.mxu0 0.0
    %71 = vmatpush1.msra.mxu0 0.0
    %72 = vmatprep.subr.mxu0 0.0
    %73 = vmatpush1.msra.mxu0 0.0
    %74 = vmatprep.subr.mxu0 0.0
    %75 = vmatpush1.msra.mxu0 0.0
    %76 = vmatprep.subr.mxu0 0.0
    %77 = vmatpush1.msra.mxu0 0.0
    %78 = vmatprep.subr.mxu0 0.0
    %79 = vmatpush1.msra.mxu0 0.0
    %80 = vmatprep.subr.mxu0 0.0
    %81 = vmatpush1.msra.mxu0 0.0
    %82 = vmatprep.subr.mxu0 0.0
    %83 = vmatpush1.msra.mxu0 0.0
    %84 = vmatprep.subr.mxu0 0.0
    %85 = vmatpush1.msra.mxu0 0.0
    %86 = vmatprep.subr.mxu0 0.0
    %87 = vmatpush1.msra.mxu0 0.0
    %88 = vmatprep.subr.mxu0 0.0
    %89 = vmatpush1.msra.mxu0 0.0
    %90 = vmatprep.subr.mxu0 0.0
    %91 = vmatpush1.msra.mxu0 0.0
    %92 = vmatprep.subr.mxu0 0.0
    %93 = vmatpush1.msra.mxu0 0.0
    %94 = vmatprep.subr.mxu0 0.0
    %95 = vmatpush1.msra.mxu0 0.0
    %96 = vmatprep.subr.mxu0 0.0
    %97 = vmatpush1.msra.mxu0 0.0
    %98 = vmatprep.subr.mxu0 0.0
    %99 = vmatpush1.msra.mxu0 0.0
    %100 = vmatprep.subr.mxu0 0.0
    %101 = vmatpush1.msra.mxu0 0.0
    %102 = vmatprep.subr.mxu0 0.0
    %103 = vmatpush1.msra.mxu0 0.0
    %104 = vmatprep.subr.mxu0 0.0
    %105 = vmatpush1.msra.mxu0 0.0
    %106 = vmatprep.subr.mxu0 0.0
    %107 = vmatpush1.msra.mxu0 0.0
    %108 = vmatprep.subr.mxu0 0.0
    %109 = vmatpush1.msra.mxu0 0.0
    %110 = vmatprep.subr.mxu0 0.0
    %111 = vmatpush1.msra.mxu0 0.0
    %112 = vmatprep.subr.mxu0 0.0
    %113 = vmatpush1.msra.mxu0 0.0
    %114 = vmatprep.subr.mxu0 0.0
    %115 = vmatpush1.msra.mxu0 0.0
    %116 = vmatprep.subr.mxu0 0.0
    %117 = vmatpush1.msra.mxu0 0.0
    %118 = vmatprep.subr.mxu0 0.0
    %119 = vmatpush1.msra.mxu0 0.0
    %120 = vmatprep.subr.mxu0 0.0
    %121 = vmatpush1.msra.mxu0 0.0
    %122 = vmatprep.subr.mxu0 0.0
    %123 = vmatpush1.msra.mxu0 0.0
    %124 = vmatprep.subr.mxu0 0.0
    %125 = vmatpush1.msra.mxu0 0.0
    %126 = vmatprep.mubr.f32.mxu0 0.0
    %127 = vmatmul.mubr.f32.gmra.mrb[0].mxu0 %v60
    %v128 = vpop.f32.mrb[0].mxu0
    %v129 = vadd.f32 %v56, %v128
    %v130 = vpop.f32.mrb[0].mxu0
    %131 = vdwg.mxu0
    %v132 = vmax.f32 %v129, 0.0
    %v133 = vld [vmem:[%s4] sm:$0xff]
    %v134 = vld [vmem:[%s4 + $0x8] sm:$0xff]
    %v135 = vld [vmem:[%s4 + $0x10] sm:$0xff]
    %v136 = vld [vmem:[%s4 + $0x18] sm:$0xff]
    %v137 = vld [vmem:[%s4 + $0x20] sm:$0xff]
    %v138 = vld [vmem:[%s4 + $0x28] sm:$0xff]
    %v139 = vld [vmem:[%s4 + $0x30] sm:$0xff]
    %v140 = vld [vmem:[%s4 + $0x38] sm:$0xff]
    %v141 = vld [vmem:[%s5] sm:$0x1]
    %v143 = vlaneseq
    %v144 = vshrl.u32 %v143, 7
    %v145 = vsub.s32 0, %v144
    %v146 = vrot.slane %v141, %v145
    %vm148 = vcmask 523264
    %v150 = vsel %vm148, %v132, 0
    %152 = vmatprep.subr.mxu0 0.0
    %153 = vmatpush1.msra.mxu0 %v133
    %154 = vmatprep.subr.mxu0 0.0
    %155 = vmatpush1.msra.mxu0 %v134
    %156 = vmatprep.subr.mxu0 0.0
    %157 = vmatpush1.msra.mxu0 %v135
    %158 = vmatprep.subr.mxu0 0.0
    %159 = vmatpush1.msra.mxu0 %v136
    %160 = vmatprep.subr.mxu0 0.0
    %161 = vmatpush1.msra.mxu0 %v137
    %162 = vmatprep.subr.mxu0 0.0
    %163 = vmatpush1.msra.mxu0 %v138
    %164 = vmatprep.subr.mxu0 0.0
    %165 = vmatpush1.msra.mxu0 %v139
    %166 = vmatprep.subr.mxu0 0.0
    %167 = vmatpush1.msra.mxu0 %v140
    %168 = vmatprep.subr.mxu0 0.0
    %169 = vmatpush1.msra.mxu0 0.0
    %170 = vmatprep.subr.mxu0 0.0
    %171 = vmatpush1.msra.mxu0 0.0
    %172 = vmatprep.subr.mxu0 0.0
    %173 = vmatpush1.msra.mxu0 0.0
    %174 = vmatprep.subr.mxu0 0.0
    %175 = vmatpush1.msra.mxu0 0.0
    %176 = vmatprep.subr.mxu0 0.0
    %177 = vmatpush1.msra.mxu0 0.0
    %178 = vmatprep.subr.mxu0 0.0
    %179 = vmatpush1.msra.mxu0 0.0
    %180 = vmatprep.subr.mxu0 0.0
    %181 = vmatpush1.msra.mxu0 0.0
    %182 = vmatprep.subr.mxu0 0.0
    %183 = vmatpush1.msra.mxu0 0.0
    %184 = vmatprep.subr.mxu0 0.0
    %185 = vmatpush1.msra.mxu0 0.0
    %186 = vmatprep.subr.mxu0 0.0
    %187 = vmatpush1.msra.mxu0 0.0
    %188 = vmatprep.subr.mxu0 0.0
    %189 = vmatpush1.msra.mxu0 0.0
    %190 = vmatprep.subr.mxu0 0.0
    %191 = vmatpush1.msra.mxu0 0.0
    %192 = vmatprep.subr.mxu0 0.0
    %193 = vmatpush1.msra.mxu0 0.0
    %194 = vmatprep.subr.mxu0 0.0
    %195 = vmatpush1.msra.mxu0 0.0
    %196 = vmatprep.subr.mxu0 0.0
    %197 = vmatpush1.msra.mxu0 0.0
    %198 = vmatprep.subr.mxu0 0.0
    %199 = vmatpush1.msra.mxu0 0.0
    %200 = vmatprep.subr.mxu0 0.0
    %201 = vmatpush1.msra.mxu0 0.0
    %202 = vmatprep.subr.mxu0 0.0
    %203 = vmatpush1.msra.mxu0 0.0
    %204 = vmatprep.subr.mxu0 0.0
    %205 = vmatpush1.msra.mxu0 0.0
    %206 = vmatprep.subr.mxu0 0.0
    %207 = vmatpush1.msra.mxu0 0.0
    %208 = vmatprep.subr.mxu0 0.0
    %209 = vmatpush1.msra.mxu0 0.0
    %210 = vmatprep.subr.mxu0 0.0
    %211 = vmatpush1.msra.mxu0 0.0
    %212 = vmatprep.subr.mxu0 0.0
    %213 = vmatpush1.msra.mxu0 0.0
    %214 = vmatprep.subr.mxu0 0.0
    %215 = vmatpush1.msra.mxu0 0.0
    %216 = vmatprep.mubr.f32.mxu0 0.0
    %217 = vmatmul.mubr.f32.gmra.mrb[0].mxu0 %v150
    %v218 = vpop.f32.mrb[0].mxu0
    %v219 = vadd.f32 %v146, %v218
    %v220 = vpop.f32.mrb[0].mxu0
    %221 = vdwg.mxu0
    %v222 = vmax.f32 %v219, 0.0
    %v223 = vld [vmem:[%s6] sm:$0xff]
    %v224 = vld [vmem:[%s6 + $0x8] sm:$0xff]
    %v225 = vld [vmem:[%s6 + $0x10] sm:$0xff]
    %v226 = vld [vmem:[%s6 + $0x18] sm:$0xff]
    %v227 = vld [vmem:[%s6 + $0x20] sm:$0xff]
    %v228 = vld [vmem:[%s6 + $0x28] sm:$0xff]
    %v229 = vld [vmem:[%s6 + $0x30] sm:$0xff]
    %v230 = vld [vmem:[%s6 + $0x38] sm:$0xff]
    %v231 = vld [vmem:[%s7] sm:$0x1]
    %v233 = vlaneseq
    %v234 = vshrl.u32 %v233, 7
    %v235 = vsub.s32 0, %v234
    %v236 = vrot.slane %v231, %v235
    %v239 = vsel %vm148, %v222, 0
    %241 = vmatprep.subr.mxu0 0.0
    %242 = vmatpush1.msra.mxu0 %v223
    %243 = vmatprep.subr.mxu0 0.0
    %244 = vmatpush1.msra.mxu0 %v224
    %245 = vmatprep.subr.mxu0 0.0
    %246 = vmatpush1.msra.mxu0 %v225
    %247 = vmatprep.subr.mxu0 0.0
    %248 = vmatpush1.msra.mxu0 %v226
    %249 = vmatprep.subr.mxu0 0.0
    %250 = vmatpush1.msra.mxu0 %v227
    %251 = vmatprep.subr.mxu0 0.0
    %252 = vmatpush1.msra.mxu0 %v228
    %253 = vmatprep.subr.mxu0 0.0
    %254 = vmatpush1.msra.mxu0 %v229
    %255 = vmatprep.subr.mxu0 0.0
    %256 = vmatpush1.msra.mxu0 %v230
    %257 = vmatprep.subr.mxu0 0.0
    %258 = vmatpush1.msra.mxu0 0.0
    %259 = vmatprep.subr.mxu0 0.0
    %260 = vmatpush1.msra.mxu0 0.0
    %261 = vmatprep.subr.mxu0 0.0
    %262 = vmatpush1.msra.mxu0 0.0
    %263 = vmatprep.subr.mxu0 0.0
    %264 = vmatpush1.msra.mxu0 0.0
    %265 = vmatprep.subr.mxu0 0.0
    %266 = vmatpush1.msra.mxu0 0.0
    %267 = vmatprep.subr.mxu0 0.0
    %268 = vmatpush1.msra.mxu0 0.0
    %269 = vmatprep.subr.mxu0 0.0
    %270 = vmatpush1.msra.mxu0 0.0
    %271 = vmatprep.subr.mxu0 0.0
    %272 = vmatpush1.msra.mxu0 0.0
    %273 = vmatprep.subr.mxu0 0.0
    %274 = vmatpush1.msra.mxu0 0.0
    %275 = vmatprep.subr.mxu0 0.0
    %276 = vmatpush1.msra.mxu0 0.0
    %277 = vmatprep.subr.mxu0 0.0
    %278 = vmatpush1.msra.mxu0 0.0
    %279 = vmatprep.subr.mxu0 0.0
    %280 = vmatpush1.msra.mxu0 0.0
    %281 = vmatprep.subr.mxu0 0.0
    %282 = vmatpush1.msra.mxu0 0.0
    %283 = vmatprep.subr.mxu0 0.0
    %284 = vmatpush1.msra.mxu0 0.0
    %285 = vmatprep.subr.mxu0 0.0
    %286 = vmatpush1.msra.mxu0 0.0
    %287 = vmatprep.subr.mxu0 0.0
    %288 = vmatpush1.msra.mxu0 0.0
    %289 = vmatprep.subr.mxu0 0.0
    %290 = vmatpush1.msra.mxu0 0.0
    %291 = vmatprep.subr.mxu0 0.0
    %292 = vmatpush1.msra.mxu0 0.0
    %293 = vmatprep.subr.mxu0 0.0
    %294 = vmatpush1.msra.mxu0 0.0
    %295 = vmatprep.subr.mxu0 0.0
    %296 = vmatpush1.msra.mxu0 0.0
    %297 = vmatprep.subr.mxu0 0.0
    %298 = vmatpush1.msra.mxu0 0.0
    %299 = vmatprep.subr.mxu0 0.0
    %300 = vmatpush1.msra.mxu0 0.0
    %301 = vmatprep.subr.mxu0 0.0
    %302 = vmatpush1.msra.mxu0 0.0
    %303 = vmatprep.subr.mxu0 0.0
    %304 = vmatpush1.msra.mxu0 0.0
    %305 = vmatprep.mubr.f32.mxu0 0.0
    %306 = vmatmul.mubr.f32.gmra.mrb[0].mxu0 %v239
    %v307 = vpop.f32.mrb[0].mxu0
    %v308 = vadd.f32 %v236, %v307
    %v309 = vpop.f32.mrb[0].mxu0
    %310 = vdwg.mxu0
    %v311 = vtanh.pop %v308
    %v312 = vstv %s45
    %v313 = vmul.f32 %v312, %v311
    %vm314 = vcmask 64512
    %315 = vst.msk [vmem:[#allocation6] sm:$0xff] %vm314, %v313
    // Predicated region
    $region38: #{tpu_custom_call.1} parent=1 // pred_check
      _
    $region39: #{tpu_custom_call.1} parent=1 // pred_check_branch
      %317 = sbr.rel (0) target = $region41
    $region40: #{tpu_custom_call.1} parent=1 // pred_region
      %s319 = ssub.s32 128, 128
      %320 = vsyncadd [#allocation5], %s319
      %s322 = sshll.u32 [#allocation6], 4
      %s323 = int_to_ptr.vmem [resolvable:$true] %s322
      %325 = dma.vmem_to_hbm [thread:$0]  %s323, 128, %s8, [#allocation5]
    $region41: #{tpu_custom_call.1} parent=1 // pred_fallthru
      _
    // Predicated region
    $region42: #{tpu_custom_call.1} parent=1 // pred_check
      _
    $region43: #{tpu_custom_call.1} parent=1 // pred_check_branch
      %327 = sbr.rel (0) target = $region45
    $region44: #{tpu_custom_call.1} parent=1 // pred_region
      %328 = dma.done [#allocation5], 128
    $region45: #{tpu_custom_call.1} parent=1 // pred_fallthru
      _
    %329 = vsyncpa [#allocation4], 1
    %330 = vsyncpa [#allocation5], 1

</llo_original>
